<compile_context>
chip_gen: v7x
topology: tpu7x:2x2x1
jax: 0.10.0
libtpu: 0.0.40
codegen_flags: <defaults>
</compile_context>

<pallas_src>
import functools

import jax
import jax.numpy as jnp
from jax import lax
from jax.experimental import pallas as pl
from jax.experimental.pallas import tpu as pltpu

DROPOUT_P = 1.0       # from module __init__  (dropout_p = 1)
SCALE_FACTOR = 1.0    # from module globals   (scale_factor = 1)
HIDDEN_SIZE = 1       # unused by the forward pass (kept for fidelity)


def _flash_attention_kernel(q_ref, k_ref, v_ref, o_ref, m_sc, l_sc, acc_sc,
                            *, scale_factor):
    """One (batch, q-tile, kv-tile) grid step of online-softmax attention.

    Blocks: q/o (1, tq, D), k/v (1, tk, D).  m/l/acc scratch stay resident in VMEM
    across the kv axis (output BlockSpec is constant in kv).
    """
    kv = pl.program_id(2)

    @pl.when(kv == 0)
    def _():
        m_sc[...] = jnp.full_like(m_sc, -jnp.inf)
        l_sc[...] = jnp.zeros_like(l_sc)
        acc_sc[...] = jnp.zeros_like(acc_sc)

    # bf16-fed MXU dots with f32 accumulation (full MXU throughput on all generations).
    q = q_ref[0].astype(jnp.bfloat16)                      # (tq, D)
    k = k_ref[0].astype(jnp.bfloat16)                      # (tk, D)
    # q @ k^T without materializing k.T: contract the last dim of both operands.
    s = lax.dot_general(q, k, (((1,), (1,)), ((), ())),
                        preferred_element_type=jnp.float32)  # (tq, tk) f32
    if scale_factor != 1.0:                                 # trace-time: skip dead multiply
        s = s * jnp.float32(scale_factor)

    # Online softmax -- all softmax math in f32 (v5e has no bf16 VPU/EUP).
    m_prev = m_sc[...]
    m_new = jnp.maximum(m_prev, jnp.max(s, axis=-1, keepdims=True))
    alpha = jnp.exp(m_prev - m_new)
    p = jnp.exp(s - m_new)
    l_sc[...] = alpha * l_sc[...] + jnp.sum(p, axis=-1, keepdims=True)
    acc_sc[...] = alpha * acc_sc[...] + jnp.dot(
        p.astype(jnp.bfloat16), v_ref[0].astype(jnp.bfloat16),
        preferred_element_type=jnp.float32)
    m_sc[...] = m_new

    @pl.when(kv == pl.num_programs(2) - 1)
    def _():
        inv_l = pl.reciprocal(l_sc[...], approx=True)       # EUP vrcp: ~free slot
        o_ref[0] = (acc_sc[...] * inv_l).astype(o_ref.dtype)


def _pick_tiles(S):
    """128-aligned (tq, tk) when S allows, else full-extent blocks.

    tq, tk <= 256 keeps double-buffered f32 blocks (D=128) around ~1 MiB: safe under
    v7x's 64 MiB VMEM and default scoped limits on v5e/v6e (v6e could raise tk to 512).
    """
    if S % 128 == 0:
        tq, tk = min(S, 256), min(S, 256)
        while S % tq:
            tq //= 2
        while S % tk:
            tk //= 2
        return tq, tk
    return S, S


def _run_attention(query, key, value):
    """softmax(query @ key^T * scale_factor) @ value via a flash-style Pallas kernel."""
    B, S, D = query.shape
    assert key.shape == (B, S, D) and value.shape[:2] == (B, S)
    Dv = value.shape[-1]
    # TODO(synk): if Dv were small (<128), fold batch/heads into the lane dim via a
    # wrapper-side reshape so output stores stay unmasked; Dv=128 here is already dense.
    tq, tk = _pick_tiles(S)
    grid = (B, S // tq, S // tk)

    kernel = functools.partial(_flash_attention_kernel, scale_factor=SCALE_FACTOR)
    return pl.pallas_call(
        kernel,
        out_shape=jax.ShapeDtypeStruct((B, S, Dv), query.dtype),
        grid_spec=pltpu.PrefetchScalarGridSpec(
            num_scalar_prefetch=0,
            grid=grid,
            in_specs=[
                pl.BlockSpec((1, tq, D), lambda b, qi, ki: (b, qi, 0)),
                pl.BlockSpec((1, tk, D), lambda b, qi, ki: (b, ki, 0)),
                pl.BlockSpec((1, tk, Dv), lambda b, qi, ki: (b, ki, 0)),
            ],
            out_specs=pl.BlockSpec((1, tq, Dv), lambda b, qi, ki: (b, qi, 0)),
            scratch_shapes=[
                pltpu.VMEM((tq, 1), jnp.float32),    # running max  m
                pltpu.VMEM((tq, 1), jnp.float32),    # running sum  l
                pltpu.VMEM((tq, Dv), jnp.float32),   # output accumulator
            ],
        ),
        compiler_params=pltpu.CompilerParams(
            # kv (reduction) axis last and "arbitrary"; batch / q-tile axes "parallel"
            # so v7x's two TensorCores each take half the grid.
            dimension_semantics=("parallel", "parallel", "arbitrary")),
    )(query, key, value)


def sdpa_dropout(query, key, value):
    """(B,S,D) x3 -> (B,S,Dv); matches Model.forward with the configured constants."""
    if DROPOUT_P >= 1.0:
        # F.dropout(p=1, training=True) zeros every element deterministically, so the
        # exact output is all zeros.  A plain XLA zeros constant is free and fuses into
        # downstream consumers; a Pallas memset would only add launch/DMA overhead.
        out_shape = query.shape[:-1] + (value.shape[-1],)
        return jnp.zeros(out_shape, dtype=query.dtype)
    if DROPOUT_P > 0.0:
        # TODO(synk): 0 < p < 1 needs PyTorch's Bernoulli RNG stream (pltpu.prng_*);
        # hard-error rather than silently returning a non-equivalent (mask-free) result.
        raise NotImplementedError("0 < dropout_p < 1 is not implemented")
    return _run_attention(query, key, value)


if __name__ == "__main__":
    # Small shapes consistent with the module's (batch, seq, hidden=128) inputs.
    B, S, D = 2, 8, 128
    k0, k1, k2 = jax.random.split(jax.random.PRNGKey(0), 3)
    query = jax.random.normal(k0, (B, S, D), dtype=jnp.float32)
    key = jax.random.normal(k1, (B, S, D), dtype=jnp.float32)
    value = jax.random.normal(k2, (B, S, D), dtype=jnp.float32)

    # 1) Module-configured forward (dropout_p = 1): exact output is all zeros.
    out = jax.block_until_ready(sdpa_dropout(query, key, value))
    assert out.shape == (B, S, D)
    assert bool(jnp.all(out == 0.0))

    # 2) Exercise the flash-attention Pallas kernel (the dropout_p == 0 path) against a
    #    plain-JAX reference with the same bf16-at-the-MXU precision contract.
    def _ref(q, k, v):
        qb, kb, vb = (x.astype(jnp.bfloat16) for x in (q, k, v))
        s = jnp.einsum("bqd,bkd->bqk", qb, kb,
                       preferred_element_type=jnp.float32) * SCALE_FACTOR
        probs = jax.nn.softmax(s, axis=-1)
        return jnp.einsum("bqk,bkd->bqd", probs.astype(jnp.bfloat16), vb,
                          preferred_element_type=jnp.float32)

    for (b, s_len, d) in [(2, 8, 128),      # full-extent blocks, single kv step
                          (2, 512, 128)]:   # 128-aligned tiles, multi-step online softmax
        rk = jax.random.split(jax.random.PRNGKey(s_len), 3)
        q = jax.random.normal(rk[0], (b, s_len, d), dtype=jnp.float32)
        k = jax.random.normal(rk[1], (b, s_len, d), dtype=jnp.float32)
        v = jax.random.normal(rk[2], (b, s_len, d), dtype=jnp.float32)
        got = jax.block_until_ready(_run_attention(q, k, v))
        ref = _ref(q, k, v)
        # Tolerance covers the approximate EUP reciprocal (~1e-3 rel) and the bf16 cast
        # point of the probabilities (unnormalized in-kernel vs normalized in the ref).
        assert jnp.allclose(got, ref, atol=3e-2, rtol=3e-2), \
            float(jnp.max(jnp.abs(got - ref)))

    print("KERNEL_OK")
</pallas_src>

<mosaic_0001>
module attributes {stable_mosaic.version = 11 : i64} {
  func.func @_flash_attention_kernel(%arg0: i32, %arg1: i32, %arg2: i32, %arg3: memref<1x8x128xf32, #tpu.memory_space<vmem>>, %arg4: memref<1x8x128xf32, #tpu.memory_space<vmem>>, %arg5: memref<1x8x128xf32, #tpu.memory_space<vmem>>, %arg6: memref<1x8x128xf32, #tpu.memory_space<vmem>>, %arg7: memref<8x1xf32, #tpu.memory_space<vmem>>, %arg8: memref<8x1xf32, #tpu.memory_space<vmem>>, %arg9: memref<8x128xf32, #tpu.memory_space<vmem>>) attributes {dimension_semantics = [#tpu.dimension_semantics<parallel>, #tpu.dimension_semantics<parallel>, #tpu.dimension_semantics<arbitrary>], iteration_bounds = array<i64: 2, 1, 1>, scalar_prefetch = 0 : i64, scratch_operands = 3 : i64, tpu.core_type = #tpu.core_type<tc>, window_params = [{transform_indices = @transform_0, window_bounds = array<i64: 1, 8, 128>}, {transform_indices = @transform_1, window_bounds = array<i64: 1, 8, 128>}, {transform_indices = @transform_2, window_bounds = array<i64: 1, 8, 128>}, {transform_indices = @transform_3, window_bounds = array<i64: 1, 8, 128>}]} {
    %c0_i32 = arith.constant 0 : i32
    %0 = arith.cmpi eq, %arg2, %c0_i32 : i32
    %1 = arith.extui %0 : i1 to i32
    %c0_i32_0 = arith.constant 0 : i32
    %2 = arith.cmpi ne, %1, %c0_i32_0 : i32
    scf.if %2 {
      %cst_26 = arith.constant 0xFF800000 : f32
      %39 = vector.broadcast %cst_26 : f32 to vector<8x1xf32>
      %c0_27 = arith.constant 0 : index
      %c0_28 = arith.constant 0 : index
      %40 = vector.load %arg7[%c0_27, %c0_28] : memref<8x1xf32, #tpu.memory_space<vmem>>, vector<8x1xf32>
      tpu.vector_store %arg7[%c0_27, %c0_28], %39 {strides = array<i32>} : memref<8x1xf32, #tpu.memory_space<vmem>>, vector<8x1xf32>,
      %cst_29 = arith.constant 0.000000e+00 : f32
      %41 = vector.broadcast %cst_29 : f32 to vector<8x1xf32>
      %c0_30 = arith.constant 0 : index
      %c0_31 = arith.constant 0 : index
      %42 = vector.load %arg8[%c0_30, %c0_31] : memref<8x1xf32, #tpu.memory_space<vmem>>, vector<8x1xf32>
      tpu.vector_store %arg8[%c0_30, %c0_31], %41 {strides = array<i32>} : memref<8x1xf32, #tpu.memory_space<vmem>>, vector<8x1xf32>,
      %cst_32 = arith.constant 0.000000e+00 : f32
      %43 = vector.broadcast %cst_32 : f32 to vector<8x128xf32>
      %c0_33 = arith.constant 0 : index
      %c0_34 = arith.constant 0 : index
      %44 = vector.load %arg9[%c0_33, %c0_34] : memref<8x128xf32, #tpu.memory_space<vmem>>, vector<8x128xf32>
      tpu.vector_store %arg9[%c0_33, %c0_34], %43 {strides = array<i32>} : memref<8x128xf32, #tpu.memory_space<vmem>>, vector<8x128xf32>,
    } else {
    }
    %c0 = arith.constant 0 : index
    %c0_1 = arith.constant 0 : index
    %c0_2 = arith.constant 0 : index
    %3 = vector.load %arg3[%c0, %c0_1, %c0_2] : memref<1x8x128xf32, #tpu.memory_space<vmem>>, vector<1x8x128xf32>
    %4 = vector.shape_cast %3 : vector<1x8x128xf32> to vector<8x128xf32>
    %5 = arith.truncf %4 : vector<8x128xf32> to vector<8x128xbf16>
    %c0_3 = arith.constant 0 : index
    %c0_4 = arith.constant 0 : index
    %c0_5 = arith.constant 0 : index
    %6 = vector.load %arg4[%c0_3, %c0_4, %c0_5] : memref<1x8x128xf32, #tpu.memory_space<vmem>>, vector<1x8x128xf32>
    %7 = vector.shape_cast %6 : vector<1x8x128xf32> to vector<8x128xf32>
    %8 = arith.truncf %7 : vector<8x128xf32> to vector<8x128xbf16>
    %cst = arith.constant dense<0.000000e+00> : vector<8x8xf32>
    %9 = tpu.matmul %5, %8, %cst {dimension_numbers = #tpu.dot_dimension_numbers<[1], [1], [0], [0], [0, 0, 1, 0], [], []>} : vector<8x128xbf16>, vector<8x128xbf16>, vector<8x8xf32> -> vector<8x8xf32>
    %c0_6 = arith.constant 0 : index
    %c0_7 = arith.constant 0 : index
    %10 = vector.load %arg7[%c0_6, %c0_7] : memref<8x1xf32, #tpu.memory_space<vmem>>, vector<8x1xf32>
    %cst_8 = arith.constant dense<0xFF800000> : vector<8xf32>
    %11 = vector.multi_reduction <maximumf>, %9, %cst_8 [1] : vector<8x8xf32> to vector<8xf32>
    %12 = vector.shape_cast %11 : vector<8xf32> to vector<8x1xf32>
    %13 = arith.maximumf %10, %12 : vector<8x1xf32>
    %14 = arith.subf %10, %13 : vector<8x1xf32>
    %15 = math.exp %14 : vector<8x1xf32>
    %16 = vector.broadcast %13 : vector<8x1xf32> to vector<8x8xf32>
    %17 = arith.subf %9, %16 : vector<8x8xf32>
    %18 = math.exp %17 : vector<8x8xf32>
    %c0_9 = arith.constant 0 : index
    %c0_10 = arith.constant 0 : index
    %19 = vector.load %arg8[%c0_9, %c0_10] : memref<8x1xf32, #tpu.memory_space<vmem>>, vector<8x1xf32>
    %20 = arith.mulf %15, %19 : vector<8x1xf32>
    %cst_11 = arith.constant dense<0.000000e+00> : vector<8xf32>
    %21 = vector.multi_reduction <add>, %18, %cst_11 [1] : vector<8x8xf32> to vector<8xf32>
    %22 = vector.shape_cast %21 : vector<8xf32> to vector<8x1xf32>
    %23 = arith.addf %20, %22 : vector<8x1xf32>
    %c0_12 = arith.constant 0 : index
    %c0_13 = arith.constant 0 : index
    %24 = vector.load %arg8[%c0_12, %c0_13] : memref<8x1xf32, #tpu.memory_space<vmem>>, vector<8x1xf32>
    tpu.vector_store %arg8[%c0_12, %c0_13], %23 {strides = array<i32>} : memref<8x1xf32, #tpu.memory_space<vmem>>, vector<8x1xf32>,
    %c0_14 = arith.constant 0 : index
    %c0_15 = arith.constant 0 : index
    %25 = vector.load %arg9[%c0_14, %c0_15] : memref<8x128xf32, #tpu.memory_space<vmem>>, vector<8x128xf32>
    %26 = vector.broadcast %15 : vector<8x1xf32> to vector<8x128xf32>
    %27 = arith.mulf %26, %25 : vector<8x128xf32>
    %28 = arith.truncf %18 : vector<8x8xf32> to vector<8x8xbf16>
    %c0_16 = arith.constant 0 : index
    %c0_17 = arith.constant 0 : index
    %c0_18 = arith.constant 0 : index
    %29 = vector.load %arg5[%c0_16, %c0_17, %c0_18] : memref<1x8x128xf32, #tpu.memory_space<vmem>>, vector<1x8x128xf32>
    %30 = vector.shape_cast %29 : vector<1x8x128xf32> to vector<8x128xf32>
    %31 = arith.truncf %30 : vector<8x128xf32> to vector<8x128xbf16>
    %cst_19 = arith.constant dense<0.000000e+00> : vector<8x128xf32>
    %32 = tpu.matmul %28, %31, %cst_19 {dimension_numbers = #tpu.dot_dimension_numbers<[1], [0], [0], [1], [0, 0, 1, 1], [], []>} : vector<8x8xbf16>, vector<8x128xbf16>, vector<8x128xf32> -> vector<8x128xf32>
    %33 = arith.addf %27, %32 : vector<8x128xf32>
    %c0_20 = arith.constant 0 : index
    %c0_21 = arith.constant 0 : index
    %34 = vector.load %arg9[%c0_20, %c0_21] : memref<8x128xf32, #tpu.memory_space<vmem>>, vector<8x128xf32>
    tpu.vector_store %arg9[%c0_20, %c0_21], %33 {strides = array<i32>} : memref<8x128xf32, #tpu.memory_space<vmem>>, vector<8x128xf32>,
    %c0_22 = arith.constant 0 : index
    %c0_23 = arith.constant 0 : index
    %35 = vector.load %arg7[%c0_22, %c0_23] : memref<8x1xf32, #tpu.memory_space<vmem>>, vector<8x1xf32>
    tpu.vector_store %arg7[%c0_22, %c0_23], %13 {strides = array<i32>} : memref<8x1xf32, #tpu.memory_space<vmem>>, vector<8x1xf32>,
    %c0_i32_24 = arith.constant 0 : i32
    %36 = arith.cmpi eq, %arg2, %c0_i32_24 : i32
    %37 = arith.extui %36 : i1 to i32
    %c0_i32_25 = arith.constant 0 : i32
    %38 = arith.cmpi ne, %37, %c0_i32_25 : i32
    scf.if %38 {
      %c0_26 = arith.constant 0 : index
      %c0_27 = arith.constant 0 : index
      %39 = vector.load %arg8[%c0_26, %c0_27] : memref<8x1xf32, #tpu.memory_space<vmem>>, vector<8x1xf32>
      %40 = tpu.reciprocal %39 {approx = true} : vector<8x1xf32> -> vector<8x1xf32>
      %c0_28 = arith.constant 0 : index
      %c0_29 = arith.constant 0 : index
      %41 = vector.load %arg9[%c0_28, %c0_29] : memref<8x128xf32, #tpu.memory_space<vmem>>, vector<8x128xf32>
      %42 = vector.broadcast %40 : vector<8x1xf32> to vector<8x128xf32>
      %43 = arith.mulf %41, %42 : vector<8x128xf32>
      %c0_30 = arith.constant 0 : index
      %c0_31 = arith.constant 0 : index
      %c0_32 = arith.constant 0 : index
      %44 = vector.load %arg6[%c0_30, %c0_31, %c0_32] : memref<1x8x128xf32, #tpu.memory_space<vmem>>, vector<1x8x128xf32>
      %45 = vector.shape_cast %44 : vector<1x8x128xf32> to vector<8x128xf32>
      %46 = vector.shape_cast %43 : vector<8x128xf32> to vector<1x8x128xf32>
      tpu.vector_store %arg6[%c0_30, %c0_31, %c0_32], %46 {strides = array<i32>} : memref<1x8x128xf32, #tpu.memory_space<vmem>>, vector<1x8x128xf32>,
    } else {
    }
    return
  }
  func.func @transform_0(%arg0: i32, %arg1: i32, %arg2: i32) -> (i32, i32, i32) {
    %c0_i32 = arith.constant 0 : i32
    %c0_i32_0 = arith.constant 0 : i32
    return %arg0, %arg1, %c0_i32 : i32, i32, i32
  }
  func.func @transform_1(%arg0: i32, %arg1: i32, %arg2: i32) -> (i32, i32, i32) {
    %c0_i32 = arith.constant 0 : i32
    %c0_i32_0 = arith.constant 0 : i32
    return %arg0, %arg2, %c0_i32 : i32, i32, i32
  }
  func.func @transform_2(%arg0: i32, %arg1: i32, %arg2: i32) -> (i32, i32, i32) {
    %c0_i32 = arith.constant 0 : i32
    %c0_i32_0 = arith.constant 0 : i32
    return %arg0, %arg2, %c0_i32 : i32, i32, i32
  }
  func.func @transform_3(%arg0: i32, %arg1: i32, %arg2: i32) -> (i32, i32, i32) {
    %c0_i32 = arith.constant 0 : i32
    %c0_i32_0 = arith.constant 0 : i32
    return %arg0, %arg1, %c0_i32 : i32, i32, i32
  }
}

</mosaic_0001>

<llo_original>
// kernel: tpu_custom_call.1
$region0: #{tpu_custom_call.1}
  #allocation0 [shape = 'u32[]', space=smem, size = 0x4, offset = 0x4, fixed_abs, tag = 'smem constant byte address 0x4 - core index']
  #allocation1 [shape = 'u32[144,128]{1,0:T(1,128)}', space=vmem, size = 0x12000, scoped, tag = 'internal scratch']
  #allocation2 [shape = 'f32[8,1]{1,0:T(8,128)}', space=vmem, size = 0x1000, scoped, tag = 'scratch operand']
  #allocation3 [shape = 'f32[8,1]{1,0:T(8,128)}', space=vmem, size = 0x1000, scoped, tag = 'scratch operand']
  #allocation4 [shape = 'f32[8,128]{1,0:T(8,128)}', space=vmem, size = 0x1000, scoped, tag = 'scratch operand']
  %s0 = inlined_call_operand.hbm [shape: f32[2,8,128], index: 0, kind: input, shape index: {}]
  %s1 = inlined_call_operand.hbm [shape: f32[2,8,128], index: 1, kind: input, shape index: {}]
  %s2 = inlined_call_operand.hbm [shape: f32[2,8,128], index: 2, kind: input, shape index: {}]
  %s3 = inlined_call_operand.hbm [shape: f32[2,8,128], index: 3, kind: output, shape index: {}]
  %s4 = sld [smem:[#allocation0]]
  $region65: #{tpu_custom_call.1} parent=0
    _
  %s6 = ssub.s32 1, %s4
  %s7 = scalar_select 0, %s6, %s4
  $region1: #{tpu_custom_call.1} parent=0
    #allocation5 [shape = 'u8[8192]{0}', space=vmem, size = 0x2000, scoped, tag = 'input window, operand 0']
    #allocation6 [shape = 's32[2]{0}', space=sflag, size = 0x8, scoped, tag = 'scoped memory for tpu_custom_call.1']
    #allocation7 [shape = 's32[2]{0}', space=sflag, size = 0x8, scoped, tag = 'scoped memory for tpu_custom_call.1']
    #allocation8 [shape = 'u8[8192]{0}', space=vmem, size = 0x2000, scoped, tag = 'input window, operand 1']
    #allocation9 [shape = 's32[2]{0}', space=sflag, size = 0x8, scoped, tag = 'scoped memory for tpu_custom_call.1']
    #allocation10 [shape = 'u8[8192]{0}', space=vmem, size = 0x2000, scoped, tag = 'input window, operand 2']
    #allocation11 [shape = 'u8[8192]{0}', space=vmem, size = 0x2000, scoped, tag = 'output window, operand 0']
    %8 = vsyncpa [#allocation6], 0
    %s9 = scalar_lea.sflag [#allocation6], 1
    %10 = vsyncpa %s9, 0
    %11 = vsyncpa [#allocation9], 0
    %s12 = scalar_lea.sflag [#allocation9], 1
    %13 = vsyncpa %s12, 0
    %14 = vsyncpa [#allocation7], 0
    %s15 = scalar_lea.sflag [#allocation7], 1
    %16 = vsyncpa %s15, 0
    loop: start=0, step=1, limit=4
    $region2: #{tpu_custom_call.1} parent=1 // loop_pre_header
      _
    $region3: #{tpu_custom_call.1} parent=1 // loop_header
      %s18 = sphi 0, %s22
      %p19 = scmp.ge.s32.totalorder %s18, 4
      %s25 = sphi 0, %s44
      %s26 = sphi 0, %s40
      %s27 = sphi 0, %s36
      %s28 = sphi 0, %s25
      %s29 = sphi 0, %s26
      %s30 = sphi 0, %s27
      %s31 = sphi 0, %s28
      %s32 = sphi 0, %s29
      %s33 = sphi 0, %s30
      %s49 = sphi 0, %s51
      %s52 = sphi 0, %s49
      %s53 = sphi 0, %s52
      %s69 = sphi 0, %s53
      %s77 = sphi 0, %s79
      %s80 = sphi 0, %s77
      %s81 = sphi 0, %s80
      %s97 = sphi 0, %s81
      %s105 = sphi 0, %s107
      %s108 = sphi 0, %s105
      %s109 = sphi 0, %s108
      %s125 = sphi 0, %s109
      %s133 = sphi 0, %s135
      %s136 = sphi 0, %s133
      %s137 = sphi 0, %s136
      %s153 = sphi 0, %s137
    $region4: #{tpu_custom_call.1} parent=1 // loop_header_branch
      %21 = sbr.rel (%p19) target = $region8
    $region5: #{tpu_custom_call.1} parent=1 // loop_body
      %s23 = ssub.s32 %s18, 1
      %s24 = ssub.s32 %s18, 2
      %s34 = sadd.s32 1, %s27
      %p35 = scmp.ge.s32.totalorder %s34, 1
      %s36 = scalar_select %p35, 0, %s34
      %s37 = sadd.s32 1, %s26
      %s38 = scalar_select %p35, %s37, %s26
      %p39 = scmp.ge.s32.totalorder %s38, 1
      %s40 = scalar_select %p39, 0, %s38
      %s41 = sadd.s32 1, %s25
      %s42 = scalar_select %p39, %s41, %s25
      %p43 = scmp.ge.s32.totalorder %s42, 2
      %s44 = scalar_select %p43, 0, %s42
      %s45 = ssub.s32 %s25, %s44
      %s46 = ssub.s32 %s26, %s40
      %s47 = sor.u32 %s45, %s46
      %p48 = scmp.eq.s32.totalorder %s47, 0
      %s50 = sadd.s32 %s49, 1
      %s51 = scalar_select %p48, %s49, %s50
      %p54 = pneg %p48
      %p55 = scmp.eq.s32.totalorder %s18, 1
      %p56 = por %p54, %p55
      %p57 = scmp.ne.s32.totalorder %s49, %s52
      %p58 = scmp.eq.s32.totalorder %s18, 0
      %p59 = por %p57, %p58
      %p60 = scmp.ne.s32.totalorder %s49, %s52
      %p61 = scmp.eq.s32.totalorder %s23, 1
      %p62 = por %p60, %p61
      %p63 = scmp.ne.s32.totalorder %s52, %s53
      %p64 = scmp.eq.s32.totalorder %s23, 0
      %p65 = por %p63, %p64
      %p66 = scmp.ne.s32.totalorder %s52, %s53
      %p67 = scmp.eq.s32.totalorder %s24, 1
      %p68 = por %p66, %p67
      %p70 = scmp.ne.s32.totalorder %s53, %s69
      %p71 = scmp.eq.s32.totalorder %s24, 0
      %p72 = por %p70, %p71
      %s73 = ssub.s32 %s25, %s44
      %s74 = ssub.s32 %s27, %s36
      %s75 = sor.u32 %s73, %s74
      %p76 = scmp.eq.s32.totalorder %s75, 0
      %s78 = sadd.s32 %s77, 1
      %s79 = scalar_select %p76, %s77, %s78
      %p82 = pneg %p76
      %p83 = scmp.eq.s32.totalorder %s18, 1
      %p84 = por %p82, %p83
      %p85 = scmp.ne.s32.totalorder %s77, %s80
      %p86 = scmp.eq.s32.totalorder %s18, 0
      %p87 = por %p85, %p86
      %p88 = scmp.ne.s32.totalorder %s77, %s80
      %p89 = scmp.eq.s32.totalorder %s23, 1
      %p90 = por %p88, %p89
      %p91 = scmp.ne.s32.totalorder %s80, %s81
      %p92 = scmp.eq.s32.totalorder %s23, 0
      %p93 = por %p91, %p92
      %p94 = scmp.ne.s32.totalorder %s80, %s81
      %p95 = scmp.eq.s32.totalorder %s24, 1
      %p96 = por %p94, %p95
      %p98 = scmp.ne.s32.totalorder %s81, %s97
      %p99 = scmp.eq.s32.totalorder %s24, 0
      %p100 = por %p98, %p99
      %s101 = ssub.s32 %s25, %s44
      %s102 = ssub.s32 %s27, %s36
      %s103 = sor.u32 %s101, %s102
      %p104 = scmp.eq.s32.totalorder %s103, 0
      %s106 = sadd.s32 %s105, 1
      %s107 = scalar_select %p104, %s105, %s106
      %p110 = pneg %p104
      %p111 = scmp.eq.s32.totalorder %s18, 1
      %p112 = por %p110, %p111
      %p113 = scmp.ne.s32.totalorder %s105, %s108
      %p114 = scmp.eq.s32.totalorder %s18, 0
      %p115 = por %p113, %p114
      %p116 = scmp.ne.s32.totalorder %s105, %s108
      %p117 = scmp.eq.s32.totalorder %s23, 1
      %p118 = por %p116, %p117
      %p119 = scmp.ne.s32.totalorder %s108, %s109
      %p120 = scmp.eq.s32.totalorder %s23, 0
      %p121 = por %p119, %p120
      %p122 = scmp.ne.s32.totalorder %s108, %s109
      %p123 = scmp.eq.s32.totalorder %s24, 1
      %p124 = por %p122, %p123
      %p126 = scmp.ne.s32.totalorder %s109, %s125
      %p127 = scmp.eq.s32.totalorder %s24, 0
      %p128 = por %p126, %p127
      %s129 = ssub.s32 %s25, %s44
      %s130 = ssub.s32 %s26, %s40
      %s131 = sor.u32 %s129, %s130
      %p132 = scmp.eq.s32.totalorder %s131, 0
      %s134 = sadd.s32 %s133, 1
      %s135 = scalar_select %p132, %s133, %s134
      %p138 = pneg %p132
      %p139 = scmp.eq.s32.totalorder %s18, 1
      %p140 = por %p138, %p139
      %p141 = scmp.ne.s32.totalorder %s133, %s136
      %p142 = scmp.eq.s32.totalorder %s18, 0
      %p143 = por %p141, %p142
      %p144 = scmp.ne.s32.totalorder %s133, %s136
      %p145 = scmp.eq.s32.totalorder %s23, 1
      %p146 = por %p144, %p145
      %p147 = scmp.ne.s32.totalorder %s136, %s137
      %p148 = scmp.eq.s32.totalorder %s23, 0
      %p149 = por %p147, %p148
      %p150 = scmp.ne.s32.totalorder %s136, %s137
      %p151 = scmp.eq.s32.totalorder %s24, 1
      %p152 = por %p150, %p151
      %p154 = scmp.ne.s32.totalorder %s137, %s153
      %p155 = scmp.eq.s32.totalorder %s24, 0
      %p156 = por %p154, %p155
      %p157 = scmp.le.s32.totalorder 1, %s18
      %p158 = scmp.lt.s32.totalorder %s18, 3
      %p159 = pnand %p157, %p158
      %p160 = pneg %p159
      // Predicated region
      $region9: #{tpu_custom_call.1} parent=5 // pred_check
        _
      $region10: #{tpu_custom_call.1} parent=5 // pred_check_branch
        %162 = sbr.rel (%p159) target = $region12
      $region11: #{tpu_custom_call.1} parent=5 // pred_region
        %s163 = ssub.s32 %s18, 1
      $region12: #{tpu_custom_call.1} parent=5 // pred_fallthru
        _
      %p164 = scmp.lt.s32.totalorder %s18, 2
      // Predicated region
      $region13: #{tpu_custom_call.1} parent=5 // pred_check
        %p165 = pneg %p164
      $region14: #{tpu_custom_call.1} parent=5 // pred_check_branch
        %167 = sbr.rel (%p165) target = $region16
      $region15: #{tpu_custom_call.1} parent=5 // pred_region
        // Predicated region
        $region17: #{tpu_custom_call.1} parent=15 // pred_check
          %p168 = pneg %p59
        $region18: #{tpu_custom_call.1} parent=15 // pred_check_branch
          %170 = sbr.rel (%p168) target = $region20
        $region19: #{tpu_custom_call.1} parent=15 // pred_region
          %s171 = sand.u32 %s49, 1
          %s172 = scalar_lea.sflag [#allocation6], %s171
          %s173 = sand.u32 %s49, 1
          %s174 = smul.addr %s173, 8
          %s175 = scalar_lea.vmem [#allocation5], %s174
          %s177 = ssub.s32 128, 128
          %178 = vsyncadd %s172, %s177
          %s179 = sadd.s32 %s26, %s25
          %s180 = smul.addr %s179, 128
          %s181 = scalar_lea.hbm %s0, %s180
          %s183 = sshll.u32 %s175, 4
          %s184 = int_to_ptr.vmem [resolvable:$true] %s183
          %186 = dma.hbm_to_vmem [thread:$0]  %s181, 128, %s184, %s172
        $region20: #{tpu_custom_call.1} parent=15 // pred_fallthru
          _
        // Predicated region
        $region21: #{tpu_custom_call.1} parent=15 // pred_check
          %p187 = pneg %p87
        $region22: #{tpu_custom_call.1} parent=15 // pred_check_branch
          %189 = sbr.rel (%p187) target = $region24
        $region23: #{tpu_custom_call.1} parent=15 // pred_region
          %s190 = sand.u32 %s18, 1
          %s191 = scalar_lea.sflag [#allocation9], %s190
          %s192 = sand.u32 %s77, 1
          %s193 = smul.addr %s192, 8
          %s194 = scalar_lea.vmem [#allocation8], %s193
          %s196 = ssub.s32 128, 128
          %197 = vsyncadd %s191, %s196
          %s198 = sadd.s32 %s27, %s25
          %s199 = smul.addr %s198, 128
          %s200 = scalar_lea.hbm %s1, %s199
          %s202 = sshll.u32 %s194, 4
          %s203 = int_to_ptr.vmem [resolvable:$true] %s202
          %205 = dma.hbm_to_vmem [thread:$0]  %s200, 128, %s203, %s191
        $region24: #{tpu_custom_call.1} parent=15 // pred_fallthru
          _
        // Predicated region
        $region25: #{tpu_custom_call.1} parent=15 // pred_check
          %p206 = pneg %p115
        $region26: #{tpu_custom_call.1} parent=15 // pred_check_branch
          %208 = sbr.rel (%p206) target = $region28
        $region27: #{tpu_custom_call.1} parent=15 // pred_region
          %s209 = sand.u32 %s18, 1
          %s210 = scalar_lea.sflag [#allocation9], %s209
          %s211 = sand.u32 %s105, 1
          %s212 = smul.addr %s211, 8
          %s213 = scalar_lea.vmem [#allocation10], %s212
          %s215 = ssub.s32 128, 128
          %216 = vsyncadd %s210, %s215
          %s217 = sadd.s32 %s27, %s25
          %s218 = smul.addr %s217, 128
          %s219 = scalar_lea.hbm %s2, %s218
          %s221 = sshll.u32 %s213, 4
          %s222 = int_to_ptr.vmem [resolvable:$true] %s221
          %224 = dma.hbm_to_vmem [thread:$0]  %s219, 128, %s222, %s210
        $region28: #{tpu_custom_call.1} parent=15 // pred_fallthru
          _
      $region16: #{tpu_custom_call.1} parent=5 // pred_fallthru
        _
      %p225 = scmp.le.s32.totalorder 1, %s18
      %p226 = scmp.lt.s32.totalorder %s18, 3
      %p227 = pnand %p225, %p226
      %p228 = pneg %p227
      // Predicated region
      $region29: #{tpu_custom_call.1} parent=5 // pred_check
        _
      $region30: #{tpu_custom_call.1} parent=5 // pred_check_branch
        %230 = sbr.rel (%p227) target = $region32
      $region31: #{tpu_custom_call.1} parent=5 // pred_region
        %s231 = ssub.s32 %s18, 1
        %s232 = sand.u32 %s52, 1
        %s233 = scalar_lea.sflag [#allocation6], %s232
        %s234 = sand.u32 %s52, 1
        %s235 = smul.addr %s234, 8
        %s236 = scalar_lea.vmem [#allocation5], %s235
        // Predicated region
        $region33: #{tpu_custom_call.1} parent=31 // pred_check
          %p237 = pneg %p65
        $region34: #{tpu_custom_call.1} parent=31 // pred_check_branch
          %239 = sbr.rel (%p237) target = $region36
        $region35: #{tpu_custom_call.1} parent=31 // pred_region
          %240 = dma.done %s233, 128
        $region36: #{tpu_custom_call.1} parent=31 // pred_fallthru
          _
        %s241 = sand.u32 %s23, 1
        %s242 = scalar_lea.sflag [#allocation9], %s241
        %s243 = sand.u32 %s80, 1
        %s244 = smul.addr %s243, 8
        %s245 = scalar_lea.vmem [#allocation8], %s244
        // Predicated region
        $region37: #{tpu_custom_call.1} parent=31 // pred_check
          %p246 = pneg %p93
        $region38: #{tpu_custom_call.1} parent=31 // pred_check_branch
          %248 = sbr.rel (%p246) target = $region40
        $region39: #{tpu_custom_call.1} parent=31 // pred_region
          %249 = dma.done %s242, 128
        $region40: #{tpu_custom_call.1} parent=31 // pred_fallthru
          _
        %s250 = sand.u32 %s23, 1
        %s251 = scalar_lea.sflag [#allocation9], %s250
        %s252 = sand.u32 %s108, 1
        %s253 = smul.addr %s252, 8
        %s254 = scalar_lea.vmem [#allocation10], %s253
        // Predicated region
        $region41: #{tpu_custom_call.1} parent=31 // pred_check
          %p255 = pneg %p121
        $region42: #{tpu_custom_call.1} parent=31 // pred_check_branch
          %257 = sbr.rel (%p255) target = $region44
        $region43: #{tpu_custom_call.1} parent=31 // pred_region
          %258 = dma.done %s251, 128
        $region44: #{tpu_custom_call.1} parent=31 // pred_fallthru
          _
        %s259 = sand.u32 %s52, 1
        %s260 = scalar_lea.sflag [#allocation6], %s259
        %s261 = sand.u32 %s52, 1
        %s262 = smul.addr %s261, 8
        %s263 = scalar_lea.vmem [#allocation5], %s262
        %p264 = pneg %p65
        %p265 = pneg %p62
        %s266 = sand.u32 %s23, 1
        %s267 = scalar_lea.sflag [#allocation9], %s266
        %s268 = sand.u32 %s80, 1
        %s269 = smul.addr %s268, 8
        %s270 = scalar_lea.vmem [#allocation8], %s269
        %p271 = pneg %p93
        %p272 = pneg %p90
        %s273 = sand.u32 %s23, 1
        %s274 = scalar_lea.sflag [#allocation9], %s273
        %s275 = sand.u32 %s108, 1
        %s276 = smul.addr %s275, 8
        %s277 = scalar_lea.vmem [#allocation10], %s276
        %p278 = pneg %p121
        %p279 = pneg %p118
        %p280 = pneg %p149
        %p281 = pneg %p146
        %s282 = sand.u32 %s136, 1
        %s283 = scalar_lea.sflag [#allocation7], %s282
        %s284 = sand.u32 %s136, 1
        %s285 = smul.addr %s284, 8
        %s286 = scalar_lea.vmem [#allocation11], %s285
        %p288 = scmp.eq.s32.totalorder %s30, 0
        // Predicated region
        $region45: #{tpu_custom_call.1} parent=31 // pred_check
          %p289 = pneg %p288
        $region46: #{tpu_custom_call.1} parent=31 // pred_check_branch
          %291 = sbr.rel (%p289) target = $region48
        $region47: #{tpu_custom_call.1} parent=31 // pred_region
          %vm292 = vcmask 7168
          %293 = vst.msk [vmem:[#allocation2] sm:$0xff] %vm292, -inf
          %294 = vst.msk [vmem:[#allocation3] sm:$0xff] %vm292, 0.0
          %295 = vst [vmem:[#allocation4] sm:$0xff] 0.0
        $region48: #{tpu_custom_call.1} parent=31 // pred_fallthru
          _
        %v296 = vld [vmem:[%s236] sm:$0xff]
        %v297 = vpack.c.bf16 %v296, %v296
        %v298 = vld [vmem:[%s245] sm:$0xff]
        %v299 = vpack.c.bf16 %v298, %v298
        %300 = vmatprep.subr.bf16.mxu0 0
        %301 = vmatpush1.bf16.xpose.msra.mxu0 %v299
        %302 = vmatprep.subr.bf16.mxu0 0
        %303 = vmatpush1.bf16.xpose.msra.mxu0 0
        %304 = vmatprep.subr.bf16.mxu0 0
        %305 = vmatpush1.bf16.xpose.msra.mxu0 0
        %306 = vmatprep.subr.bf16.mxu0 0
        %307 = vmatpush1.bf16.xpose.msra.mxu0 0
        %308 = vmatprep.subr.bf16.mxu0 0
        %309 = vmatpush1.bf16.xpose.msra.mxu0 0
        %310 = vmatprep.subr.bf16.mxu0 0
        %311 = vmatpush1.bf16.xpose.msra.mxu0 0
        %312 = vmatprep.subr.bf16.mxu0 0
        %313 = vmatpush1.bf16.xpose.msra.mxu0 0
        %314 = vmatprep.subr.bf16.mxu0 0
        %315 = vmatpush1.bf16.xpose.msra.mxu0 0
        %316 = vmatprep.subr.bf16.mxu0 0
        %317 = vmatpush1.bf16.xpose.msra.mxu0 0
        %318 = vmatprep.subr.bf16.mxu0 0
        %319 = vmatpush1.bf16.xpose.msra.mxu0 0
        %320 = vmatprep.subr.bf16.mxu0 0
        %321 = vmatpush1.bf16.xpose.msra.mxu0 0
        %322 = vmatprep.subr.bf16.mxu0 0
        %323 = vmatpush1.bf16.xpose.msra.mxu0 0
        %324 = vmatprep.subr.bf16.mxu0 0
        %325 = vmatpush1.bf16.xpose.msra.mxu0 0
        %326 = vmatprep.subr.bf16.mxu0 0
        %327 = vmatpush1.bf16.xpose.msra.mxu0 0
        %328 = vmatprep.subr.bf16.mxu0 0
        %329 = vmatpush1.bf16.xpose.msra.mxu0 0
        %330 = vmatprep.subr.bf16.mxu0 0
        %331 = vmatpush1.bf16.xpose.msra.mxu0 0
        %332 = vmatprep.mubr.bf16.mxu0 0
        %333 = vmatmul.mubr.bf16.gmra.mrb[0].mxu0 %v297
        %v334 = vpop.f32.mrb[0].mxu0
        %v335 = vadd.f32 0.0, %v334
        %v336 = vpop.f32.mrb[0].mxu0
        %v337 = vpop.f32.mrb[0].mxu0
        %v338 = vpop.f32.mrb[0].mxu0
        %339 = vdwg.mxu0
        %v340 = vld [vmem:[#allocation2] sm:$0xff]
        %vm341 = vcmask 64512
        %v342 = vsel %vm341, %v335, -inf
        %343 = vmax.xlane.f32.xlu0 %v342
        %v344 = vpop.xlane.xlu0 %343
        %v345 = vmax.f32 %v340, %v344
        %v346 = vsub.f32 %v340, %v345
        %v347 = vmul.f32 %v346, 1.442695
        %v348 = vpow.pop %v347
        %350 = vset.pattern.permute.xlu0 0
        %351 = vperm.xlu0 %350, %v345
        %v352 = vpop.permute.xlu0 %351
        %v354 = vsub.f32 %v335, %v352
        %v355 = vmul.f32 %v354, 1.442695
        %v356 = vpow.pop %v355
        %v357 = vld [vmem:[#allocation3] sm:$0xff]
        %v358 = vmul.f32 %v348, %v357
        %v359 = vsel %vm341, %v356, 0.0
        %360 = vadd.xlane.f32.xlu0 %v359
        %v361 = vpop.xlane.xlu0 %360
        %v362 = vadd.f32 %v358, %v361
        %vm363 = vcmask 7168
        %364 = vst.msk [vmem:[#allocation3] sm:$0xff] %vm363, %v362
        %v365 = vld [vmem:[#allocation4] sm:$0xff]
        %367 = vset.pattern.permute.xlu0 0
        %368 = vperm.xlu0 %367, %v348
        %v369 = vpop.permute.xlu0 %368
        %v371 = vmul.f32 %v369, %v365
        %v372 = vpack.c.bf16 %v356, %v356
        %v373 = vld [vmem:[%s254] sm:$0xff]
        %v374 = vpack.c.bf16 %v373, %v373
        %v376 = vsel %vm341, %v372, 0
        %vm378 = vcmask 1043456
        %v380 = vsel %vm378, %v374, 0
        %382 = vmatprep.subr.bf16.mxu0 0
        %383 = vmatpush1.bf16.msra.mxu0 %v380
        %384 = vmatprep.subr.bf16.mxu0 0
        %385 = vmatpush1.bf16.msra.mxu0 0
        %386 = vmatprep.subr.bf16.mxu0 0
        %387 = vmatpush1.bf16.msra.mxu0 0
        %388 = vmatprep.subr.bf16.mxu0 0
        %389 = vmatpush1.bf16.msra.mxu0 0
        %390 = vmatprep.subr.bf16.mxu0 0
        %391 = vmatpush1.bf16.msra.mxu0 0
        %392 = vmatprep.subr.bf16.mxu0 0
        %393 = vmatpush1.bf16.msra.mxu0 0
        %394 = vmatprep.subr.bf16.mxu0 0
        %395 = vmatpush1.bf16.msra.mxu0 0
        %396 = vmatprep.subr.bf16.mxu0 0
        %397 = vmatpush1.bf16.msra.mxu0 0
        %398 = vmatprep.subr.bf16.mxu0 0
        %399 = vmatpush1.bf16.msra.mxu0 0
        %400 = vmatprep.subr.bf16.mxu0 0
        %401 = vmatpush1.bf16.msra.mxu0 0
        %402 = vmatprep.subr.bf16.mxu0 0
        %403 = vmatpush1.bf16.msra.mxu0 0
        %404 = vmatprep.subr.bf16.mxu0 0
        %405 = vmatpush1.bf16.msra.mxu0 0
        %406 = vmatprep.subr.bf16.mxu0 0
        %407 = vmatpush1.bf16.msra.mxu0 0
        %408 = vmatprep.subr.bf16.mxu0 0
        %409 = vmatpush1.bf16.msra.mxu0 0
        %410 = vmatprep.subr.bf16.mxu0 0
        %411 = vmatpush1.bf16.msra.mxu0 0
        %412 = vmatprep.subr.bf16.mxu0 0
        %413 = vmatpush1.bf16.msra.mxu0 0
        %414 = vmatprep.mubr.bf16.mxu0 0
        %415 = vmatmul.mubr.bf16.gmra.mrb[0].mxu0 %v376
        %v416 = vpop.f32.mrb[0].mxu0
        %v417 = vadd.f32 0.0, %v416
        %v418 = vpop.f32.mrb[0].mxu0
        %v419 = vpop.f32.mrb[0].mxu0
        %v420 = vpop.f32.mrb[0].mxu0
        %421 = vdwg.mxu0
        %v422 = vadd.f32 %v371, %v417
        %423 = vst [vmem:[#allocation4] sm:$0xff] %v422
        %424 = vst.msk [vmem:[#allocation2] sm:$0xff] %vm363, %v345
        // Predicated region
        $region49: #{tpu_custom_call.1} parent=31 // pred_check
          %p425 = pneg %p288
        $region50: #{tpu_custom_call.1} parent=31 // pred_check_branch
          %427 = sbr.rel (%p425) target = $region52
        $region51: #{tpu_custom_call.1} parent=31 // pred_region
          %v428 = vld [vmem:[#allocation3] sm:$0xff]
          %v429 = vrcp.pop %v428
          %v430 = vld [vmem:[#allocation4] sm:$0xff]
          %432 = vset.pattern.permute.xlu0 0
          %433 = vperm.xlu0 %432, %v429
          %v434 = vpop.permute.xlu0 %433
          %v436 = vmul.f32 %v430, %v434
          %437 = vst [vmem:[%s286] sm:$0xff] %v436
        $region52: #{tpu_custom_call.1} parent=31 // pred_fallthru
          _
        %s438 = sand.u32 %s136, 1
        %s439 = scalar_lea.sflag [#allocation7], %s438
        %s440 = sand.u32 %s136, 1
        %s441 = smul.addr %s440, 8
        %s442 = scalar_lea.vmem [#allocation11], %s441
        // Predicated region
        $region53: #{tpu_custom_call.1} parent=31 // pred_check
          %p443 = pneg %p146
        $region54: #{tpu_custom_call.1} parent=31 // pred_check_branch
          %445 = sbr.rel (%p443) target = $region56
        $region55: #{tpu_custom_call.1} parent=31 // pred_region
          %s447 = ssub.s32 128, 128
          %448 = vsyncadd %s439, %s447
          %s449 = sadd.s32 %s29, %s28
          %s450 = smul.addr %s449, 128
          %s451 = scalar_lea.hbm %s3, %s450
          %s453 = sshll.u32 %s442, 4
          %s454 = int_to_ptr.vmem [resolvable:$true] %s453
          %456 = dma.vmem_to_hbm [thread:$0]  %s454, 128, %s451, %s439
        $region56: #{tpu_custom_call.1} parent=31 // pred_fallthru
          _
      $region32: #{tpu_custom_call.1} parent=5 // pred_fallthru
        _
      %p457 = scmp.le.s32.totalorder 2, %s18
      // Predicated region
      $region57: #{tpu_custom_call.1} parent=5 // pred_check
        %p458 = pneg %p457
      $region58: #{tpu_custom_call.1} parent=5 // pred_check_branch
        %460 = sbr.rel (%p458) target = $region60
      $region59: #{tpu_custom_call.1} parent=5 // pred_region
        %s461 = ssub.s32 %s18, 2
        // Predicated region
        $region61: #{tpu_custom_call.1} parent=59 // pred_check
          %p462 = pneg %p152
        $region62: #{tpu_custom_call.1} parent=59 // pred_check_branch
          %464 = sbr.rel (%p462) target = $region64
        $region63: #{tpu_custom_call.1} parent=59 // pred_region
          %s465 = sand.u32 %s137, 1
          %s466 = scalar_lea.sflag [#allocation7], %s465
          %s467 = sand.u32 %s137, 1
          %s468 = smul.addr %s467, 8
          %s469 = scalar_lea.vmem [#allocation11], %s468
          %470 = dma.done %s466, 128
        $region64: #{tpu_custom_call.1} parent=59 // pred_fallthru
          _
      $region60: #{tpu_custom_call.1} parent=5 // pred_fallthru
        _
    $region6: #{tpu_custom_call.1} parent=1 // loop_footer
      %s22 = sadd.s32 1, %s18
    $region7: #{tpu_custom_call.1} parent=1 // loop_footer_branch
      %17 = sbr.rel target = $region3
    $region8: #{tpu_custom_call.1} parent=1 // loop_exit
      _
    %471 = vsyncpa [#allocation6], 1
    %s472 = scalar_lea.sflag [#allocation6], 1
    %473 = vsyncpa %s472, 1
    %474 = vsyncpa [#allocation9], 1
    %s475 = scalar_lea.sflag [#allocation9], 1
    %476 = vsyncpa %s475, 1
    %477 = vsyncpa [#allocation7], 1
    %s478 = scalar_lea.sflag [#allocation7], 1
    %479 = vsyncpa %s478, 1

</llo_original>
